<compile_context>
chip_gen: v7x
topology: tpu7x:2x2x1
jax: 0.10.0
libtpu: 0.0.40
codegen_flags: <defaults>
</compile_context>

<pallas_src>
import functools

import jax
import jax.numpy as jnp
from jax import lax
from jax.experimental import pallas as pl
from jax.experimental.pallas import tpu as pltpu


def _round_up(x, m):
    return ((x + m - 1) // m) * m


def _gram_kernel(x_ref, o_ref, acc_ref, *, inv_scale, compute_dtype):
    k = pl.program_id(1)

    @pl.when(k == 0)
    def _init():
        acc_ref[...] = jnp.zeros_like(acc_ref)

    xt = x_ref[...]  # (TN, C, tk)
    if compute_dtype is not None and xt.dtype != jnp.dtype(compute_dtype):
        # In-kernel operand cast: HBM reads stay in the input dtype, the MXU
        # runs at the (cheaper) compute_dtype rate, accumulation stays f32.
        xt = xt.astype(compute_dtype)

    # Batched matmul contracting the last dim of BOTH operands -> (TN, C, C).
    # Same VMEM tile feeds both MXU operands; no explicit .T is requested.
    acc_ref[...] += lax.dot_general(
        xt, xt,
        dimension_numbers=(((2,), (2,)), ((0,), (0,))),
        preferred_element_type=jnp.float32,
    )

    @pl.when(k == pl.num_programs(1) - 1)
    def _finalize():
        # Direct store of the small (TN, C, C) block — no lane-flattening
        # epilogue (output traffic is negligible vs input traffic here).
        o_ref[...] = (acc_ref[...] * inv_scale).astype(o_ref.dtype)


def _hw_params():
    """Return (vmem_limit_bytes, num_tensorcores), generation-aware with safe
    fallbacks (conservative v7x-like assumptions if the query fails)."""
    kind = ""
    try:
        kind = (getattr(jax.devices()[0], "device_kind", "") or "").lower()
    except Exception:
        kind = ""
    vmem_cap = None
    try:
        info = pltpu.get_tpu_info()
        vmem_cap = getattr(info, "vmem_capacity_bytes", None)
    except Exception:
        vmem_cap = None
    if not vmem_cap:
        vmem_cap = 64 * 1024 * 1024  # conservative: v7x per-core VMEM

    # v7x: 64 MiB VMEM per TC and 2 TCs/chip; v5e/v6e: 128 MiB, 1 TC.
    num_cores = 2 if (vmem_cap <= 64 * 1024 * 1024 or "v7" in kind) else 1

    vmem_limit = min(int(vmem_cap * 3 // 4), 96 * 1024 * 1024)
    if num_cores >= 2:
        vmem_limit = min(vmem_limit, 48 * 1024 * 1024)
    return vmem_limit, num_cores


def _choose_tiles(N, C, K_eff, x_itemsize, out_itemsize, vmem_limit, num_cores):
    """Pick (TN, tk) so that 2*x_block + 2*out_block + accumulator fit within
    the generation-aware VMEM limit, with large (8-16 MiB class) x blocks."""
    c_sub = _round_up(C, 8)      # sublane padding of the C axis
    c_lane = _round_up(C, 128)   # lane padding of the trailing C axis (output)

    # Target x-block size: 16 MiB on 128 MiB-VMEM single-TC chips, 12 MiB on
    # 64 MiB-VMEM dual-TC chips (v7x needs big blocks at 3.2 TB/s but has less
    # VMEM to hold them in).
    x_target = (12 * 1024 * 1024) if num_cores >= 2 else (16 * 1024 * 1024)

    def total_bytes(tn, tk):
        x_blk = tn * c_sub * _round_up(tk, 128) * x_itemsize   # double-buffered
        out_blk = tn * c_sub * c_lane * out_itemsize           # double-buffered
        acc = tn * c_sub * c_lane * 4                          # f32 accumulator
        return 2 * x_blk + 2 * out_blk + acc

    def pick_tk(tn):
        if K_eff % 128 != 0:
            return K_eff  # full-K block (wrapper only allows this when small)
        q = K_eff // 128
        best = 128
        for d in range(1, q + 1):
            if q % d == 0:
                cand = 128 * d
                if tn * c_sub * cand * x_itemsize <= x_target:
                    best = cand
        return best

    divisors = [d for d in range(1, N + 1) if N % d == 0]
    if num_cores >= 2 and N > 1:
        # Prefer an even, balanced number of "parallel" grid steps across the
        # two TensorCores; then any >= 2 steps; largest TN within each class.
        def order(tn):
            steps = N // tn
            cls = 0 if (steps >= 2 and steps % 2 == 0) else (1 if steps >= 2 else 2)
            return (cls, -tn)
        candidates = sorted(divisors, key=order)
    else:
        # Single TensorCore: fewest, largest grid steps (no >=2-step constraint).
        candidates = sorted(divisors, reverse=True)

    headroom = 2 * 1024 * 1024  # slack for Mosaic internal scratch
    for tn in candidates:
        tk = pick_tk(tn)
        if total_bytes(tn, tk) + headroom <= vmem_limit:
            return tn, tk
    return 1, pick_tk(1)


def gram_block(inp, *, compute_dtype=None):
    """inp: (N, C, H, W) array. Returns (N, C, C) Gram matrices (inp dtype)."""
    N, C, H, W = inp.shape
    K = H * W
    out_dtype = inp.dtype

    x = inp.reshape(N, C, K)  # glue reshape in plain JAX
    x_itemsize = jnp.dtype(x.dtype).itemsize
    out_itemsize = jnp.dtype(out_dtype).itemsize

    vmem_limit, num_cores = _hw_params()
    x_target = (12 * 1024 * 1024) if num_cores >= 2 else (16 * 1024 * 1024)

    # Zero-pad K to a multiple of 128 only when the reduction actually needs
    # tiling (a single (1, C, K) block would overflow the block budget).
    # Zeros add nothing to x @ x^T; the scale keeps the original K.
    K_eff = K
    if K % 128 != 0 and _round_up(C, 8) * _round_up(K, 128) * x_itemsize > x_target:
        K_eff = _round_up(K, 128)
        x = jnp.pad(x, ((0, 0), (0, 0), (0, K_eff - K)))

    TN, tk = _choose_tiles(N, C, K_eff, x_itemsize, out_itemsize,
                           vmem_limit, num_cores)
    num_n = N // TN
    num_k = K_eff // tk
    inv_scale = 1.0 / float(C * K)  # original K — padding must not change scale

    kernel = functools.partial(
        _gram_kernel, inv_scale=inv_scale, compute_dtype=compute_dtype)

    out = pl.pallas_call(
        kernel,
        out_shape=jax.ShapeDtypeStruct((N, C, C), out_dtype),
        grid_spec=pltpu.PrefetchScalarGridSpec(
            num_scalar_prefetch=0,
            grid=(num_n, num_k),
            in_specs=[pl.BlockSpec((TN, C, tk), lambda n, k: (n, 0, k))],
            out_specs=pl.BlockSpec((TN, C, C), lambda n, k: (n, 0, 0)),
            scratch_shapes=[pltpu.VMEM((TN, C, C), jnp.float32)],
        ),
        compiler_params=pltpu.CompilerParams(
            dimension_semantics=("parallel", "arbitrary"),
            vmem_limit_bytes=vmem_limit,
        ),
    )(x)

    return out


if __name__ == "__main__":
    key = jax.random.PRNGKey(0)
    N, C, H, W = 2, 4, 16, 16
    x = jax.random.normal(key, (N, C, H, W), dtype=jnp.float32)

    g = gram_block(x)
    jax.block_until_ready(g)

    # Pure-JAX reference check
    xf = x.reshape(N, C, H * W)
    ref = jnp.einsum("nck,ndk->ncd", xf, xf) / (C * H * W)
    assert g.shape == (N, C, C)
    assert jnp.allclose(g, ref, atol=1e-5, rtol=1e-5)

    print("KERNEL_OK")
</pallas_src>

<mosaic_0001>
module attributes {stable_mosaic.version = 11 : i64} {
  func.func @_gram_kernel(%arg0: i32, %arg1: i32, %arg2: memref<1x4x256xf32, #tpu.memory_space<vmem>>, %arg3: memref<1x4x4xf32, #tpu.memory_space<vmem>>, %arg4: memref<1x4x4xf32, #tpu.memory_space<vmem>>) attributes {dimension_semantics = [#tpu.dimension_semantics<parallel>, #tpu.dimension_semantics<arbitrary>], iteration_bounds = array<i64: 2, 1>, scalar_prefetch = 0 : i64, scratch_operands = 1 : i64, tpu.core_type = #tpu.core_type<tc>, window_params = [{transform_indices = @transform_0, window_bounds = array<i64: 1, 4, 256>}, {transform_indices = @transform_1, window_bounds = array<i64: 1, 4, 4>}]} {
    %c0_i32 = arith.constant 0 : i32
    %0 = arith.cmpi eq, %arg1, %c0_i32 : i32
    %1 = arith.extui %0 : i1 to i32
    %c0_i32_0 = arith.constant 0 : i32
    %2 = arith.cmpi ne, %1, %c0_i32_0 : i32
    scf.if %2 {
      %cst_11 = arith.constant 0.000000e+00 : f32
      %11 = vector.broadcast %cst_11 : f32 to vector<1x4x4xf32>
      %c0_12 = arith.constant 0 : index
      %c0_13 = arith.constant 0 : index
      %c0_14 = arith.constant 0 : index
      %12 = vector.load %arg4[%c0_12, %c0_13, %c0_14] : memref<1x4x4xf32, #tpu.memory_space<vmem>>, vector<1x4x4xf32>
      tpu.vector_store %arg4[%c0_12, %c0_13, %c0_14], %11 {strides = array<i32>} : memref<1x4x4xf32, #tpu.memory_space<vmem>>, vector<1x4x4xf32>,
    } else {
    }
    %c0 = arith.constant 0 : index
    %c0_1 = arith.constant 0 : index
    %c0_2 = arith.constant 0 : index
    %3 = vector.load %arg2[%c0, %c0_1, %c0_2] : memref<1x4x256xf32, #tpu.memory_space<vmem>>, vector<1x4x256xf32>
    %c0_3 = arith.constant 0 : index
    %c0_4 = arith.constant 0 : index
    %c0_5 = arith.constant 0 : index
    %4 = vector.load %arg4[%c0_3, %c0_4, %c0_5] : memref<1x4x4xf32, #tpu.memory_space<vmem>>, vector<1x4x4xf32>
    %cst = arith.constant dense<0.000000e+00> : vector<1x4x4xf32>
    %5 = tpu.matmul %3, %3, %cst {dimension_numbers = #tpu.dot_dimension_numbers<[2], [2], [1], [1], [0, 0, 0, 1, 1, 1], [0], [0]>} : vector<1x4x256xf32>, vector<1x4x256xf32>, vector<1x4x4xf32> -> vector<1x4x4xf32>
    %6 = arith.addf %4, %5 : vector<1x4x4xf32>
    %c0_6 = arith.constant 0 : index
    %c0_7 = arith.constant 0 : index
    %c0_8 = arith.constant 0 : index
    %7 = vector.load %arg4[%c0_6, %c0_7, %c0_8] : memref<1x4x4xf32, #tpu.memory_space<vmem>>, vector<1x4x4xf32>
    tpu.vector_store %arg4[%c0_6, %c0_7, %c0_8], %6 {strides = array<i32>} : memref<1x4x4xf32, #tpu.memory_space<vmem>>, vector<1x4x4xf32>,
    %c0_i32_9 = arith.constant 0 : i32
    %8 = arith.cmpi eq, %arg1, %c0_i32_9 : i32
    %9 = arith.extui %8 : i1 to i32
    %c0_i32_10 = arith.constant 0 : i32
    %10 = arith.cmpi ne, %9, %c0_i32_10 : i32
    scf.if %10 {
      %c0_11 = arith.constant 0 : index
      %c0_12 = arith.constant 0 : index
      %c0_13 = arith.constant 0 : index
      %11 = vector.load %arg4[%c0_11, %c0_12, %c0_13] : memref<1x4x4xf32, #tpu.memory_space<vmem>>, vector<1x4x4xf32>
      %cst_14 = arith.constant 9.765625E-4 : f32
      %12 = vector.broadcast %cst_14 : f32 to vector<1x4x4xf32>
      %13 = arith.mulf %11, %12 : vector<1x4x4xf32>
      %c0_15 = arith.constant 0 : index
      %c0_16 = arith.constant 0 : index
      %c0_17 = arith.constant 0 : index
      %14 = vector.load %arg3[%c0_15, %c0_16, %c0_17] : memref<1x4x4xf32, #tpu.memory_space<vmem>>, vector<1x4x4xf32>
      tpu.vector_store %arg3[%c0_15, %c0_16, %c0_17], %13 {strides = array<i32>} : memref<1x4x4xf32, #tpu.memory_space<vmem>>, vector<1x4x4xf32>,
    } else {
    }
    return
  }
  func.func @transform_0(%arg0: i32, %arg1: i32) -> (i32, i32, i32) {
    %c0_i32 = arith.constant 0 : i32
    %c0_i32_0 = arith.constant 0 : i32
    return %arg0, %c0_i32, %arg1 : i32, i32, i32
  }
  func.func @transform_1(%arg0: i32, %arg1: i32) -> (i32, i32, i32) {
    %c0_i32 = arith.constant 0 : i32
    %c0_i32_0 = arith.constant 0 : i32
    %c0_i32_1 = arith.constant 0 : i32
    return %arg0, %c0_i32, %c0_i32_0 : i32, i32, i32
  }
}

</mosaic_0001>

<llo_original>
// kernel: tpu_custom_call.1
$region0: #{tpu_custom_call.1}
  #allocation0 [shape = 'u32[]', space=smem, size = 0x4, offset = 0x4, fixed_abs, tag = 'smem constant byte address 0x4 - core index']
  #allocation1 [shape = 'u32[144,128]{1,0:T(1,128)}', space=vmem, size = 0x12000, scoped, tag = 'internal scratch']
  #allocation2 [shape = 'f32[1,4,4]{2,1,0:T(4,128)}', space=vmem, size = 0x800, scoped, tag = 'scratch operand']
  %s0 = inlined_call_operand.hbm [shape: f32[2,4,256], index: 0, kind: input, shape index: {}]
  %s1 = inlined_call_operand.hbm [shape: f32[2,4,4], index: 1, kind: output, shape index: {}]
  %s2 = sld [smem:[#allocation0]]
  $region49: #{tpu_custom_call.1} parent=0
    _
  %s4 = ssub.s32 1, %s2
  %s5 = scalar_select 0, %s4, %s2
  $region1: #{tpu_custom_call.1} parent=0
    #allocation3 [shape = 'u8[8192]{0}', space=vmem, size = 0x2000, scoped, tag = 'input window, operand 0']
    #allocation4 [shape = 's32[2]{0}', space=sflag, size = 0x8, scoped, tag = 'scoped memory for tpu_custom_call.1']
    #allocation5 [shape = 's32[2]{0}', space=sflag, size = 0x8, scoped, tag = 'scoped memory for tpu_custom_call.1']
    #allocation6 [shape = 'u8[4096]{0}', space=vmem, size = 0x1000, scoped, tag = 'output window, operand 0']
    %6 = vsyncpa [#allocation4], 0
    %s7 = scalar_lea.sflag [#allocation4], 1
    %8 = vsyncpa %s7, 0
    %9 = vsyncpa [#allocation5], 0
    %s10 = scalar_lea.sflag [#allocation5], 1
    %11 = vsyncpa %s10, 0
    loop: start=0, step=1, limit=4
    $region2: #{tpu_custom_call.1} parent=1 // loop_pre_header
      _
    $region3: #{tpu_custom_call.1} parent=1 // loop_header
      %s13 = sphi 0, %s17
      %p14 = scmp.ge.s32.totalorder %s13, 4
      %s20 = sphi 0, %s32
      %s21 = sphi 0, %s28
      %s22 = sphi 0, %s20
      %s23 = sphi 0, %s21
      %s24 = sphi 0, %s22
      %s25 = sphi 0, %s23
      %s37 = sphi 0, %s39
      %s40 = sphi 0, %s37
      %s41 = sphi 0, %s40
      %s57 = sphi 0, %s41
      %s63 = sphi 0, %s65
      %s66 = sphi 0, %s63
      %s67 = sphi 0, %s66
      %s83 = sphi 0, %s67
    $region4: #{tpu_custom_call.1} parent=1 // loop_header_branch
      %16 = sbr.rel (%p14) target = $region8
    $region5: #{tpu_custom_call.1} parent=1 // loop_body
      %s18 = ssub.s32 %s13, 1
      %s19 = ssub.s32 %s13, 2
      %s26 = sadd.s32 1, %s21
      %p27 = scmp.ge.s32.totalorder %s26, 1
      %s28 = scalar_select %p27, 0, %s26
      %s29 = sadd.s32 1, %s20
      %s30 = scalar_select %p27, %s29, %s20
      %p31 = scmp.ge.s32.totalorder %s30, 2
      %s32 = scalar_select %p31, 0, %s30
      %s33 = ssub.s32 %s20, %s32
      %s34 = ssub.s32 %s21, %s28
      %s35 = sor.u32 %s33, %s34
      %p36 = scmp.eq.s32.totalorder %s35, 0
      %s38 = sadd.s32 %s37, 1
      %s39 = scalar_select %p36, %s37, %s38
      %p42 = pneg %p36
      %p43 = scmp.eq.s32.totalorder %s13, 1
      %p44 = por %p42, %p43
      %p45 = scmp.ne.s32.totalorder %s37, %s40
      %p46 = scmp.eq.s32.totalorder %s13, 0
      %p47 = por %p45, %p46
      %p48 = scmp.ne.s32.totalorder %s37, %s40
      %p49 = scmp.eq.s32.totalorder %s18, 1
      %p50 = por %p48, %p49
      %p51 = scmp.ne.s32.totalorder %s40, %s41
      %p52 = scmp.eq.s32.totalorder %s18, 0
      %p53 = por %p51, %p52
      %p54 = scmp.ne.s32.totalorder %s40, %s41
      %p55 = scmp.eq.s32.totalorder %s19, 1
      %p56 = por %p54, %p55
      %p58 = scmp.ne.s32.totalorder %s41, %s57
      %p59 = scmp.eq.s32.totalorder %s19, 0
      %p60 = por %p58, %p59
      %s61 = ssub.s32 %s20, %s32
      %p62 = scmp.eq.s32.totalorder %s61, 0
      %s64 = sadd.s32 %s63, 1
      %s65 = scalar_select %p62, %s63, %s64
      %p68 = pneg %p62
      %p69 = scmp.eq.s32.totalorder %s13, 1
      %p70 = por %p68, %p69
      %p71 = scmp.ne.s32.totalorder %s63, %s66
      %p72 = scmp.eq.s32.totalorder %s13, 0
      %p73 = por %p71, %p72
      %p74 = scmp.ne.s32.totalorder %s63, %s66
      %p75 = scmp.eq.s32.totalorder %s18, 1
      %p76 = por %p74, %p75
      %p77 = scmp.ne.s32.totalorder %s66, %s67
      %p78 = scmp.eq.s32.totalorder %s18, 0
      %p79 = por %p77, %p78
      %p80 = scmp.ne.s32.totalorder %s66, %s67
      %p81 = scmp.eq.s32.totalorder %s19, 1
      %p82 = por %p80, %p81
      %p84 = scmp.ne.s32.totalorder %s67, %s83
      %p85 = scmp.eq.s32.totalorder %s19, 0
      %p86 = por %p84, %p85
      %p87 = scmp.le.s32.totalorder 1, %s13
      %p88 = scmp.lt.s32.totalorder %s13, 3
      %p89 = pnand %p87, %p88
      %p90 = pneg %p89
      // Predicated region
      $region9: #{tpu_custom_call.1} parent=5 // pred_check
        _
      $region10: #{tpu_custom_call.1} parent=5 // pred_check_branch
        %92 = sbr.rel (%p89) target = $region12
      $region11: #{tpu_custom_call.1} parent=5 // pred_region
        %s93 = ssub.s32 %s13, 1
      $region12: #{tpu_custom_call.1} parent=5 // pred_fallthru
        _
      %p94 = scmp.lt.s32.totalorder %s13, 2
      // Predicated region
      $region13: #{tpu_custom_call.1} parent=5 // pred_check
        %p95 = pneg %p94
      $region14: #{tpu_custom_call.1} parent=5 // pred_check_branch
        %97 = sbr.rel (%p95) target = $region16
      $region15: #{tpu_custom_call.1} parent=5 // pred_region
        // Predicated region
        $region17: #{tpu_custom_call.1} parent=15 // pred_check
          %p98 = pneg %p47
        $region18: #{tpu_custom_call.1} parent=15 // pred_check_branch
          %100 = sbr.rel (%p98) target = $region20
        $region19: #{tpu_custom_call.1} parent=15 // pred_region
          %s101 = sand.u32 %s37, 1
          %s102 = scalar_lea.sflag [#allocation4], %s101
          %s103 = sand.u32 %s37, 1
          %s104 = smul.addr %s103, 8
          %s105 = scalar_lea.vmem [#allocation3], %s104
          %s106 = smul.u32 2, %s21
          %s108 = ssub.s32 128, 128
          %109 = vsyncadd %s102, %s108
          %s110 = smul.addr %s20, 2
          %s111 = sadd.s32 %s106, %s110
          %s112 = smul.addr %s111, 64
          %s113 = scalar_lea.hbm %s0, %s112
          %s115 = sshll.u32 %s105, 4
          %s116 = int_to_ptr.vmem [resolvable:$true] %s115
          %118 = dma.hbm_to_vmem [thread:$0]  %s113, 128, %s116, %s102
        $region20: #{tpu_custom_call.1} parent=15 // pred_fallthru
          _
      $region16: #{tpu_custom_call.1} parent=5 // pred_fallthru
        _
      %p119 = scmp.le.s32.totalorder 1, %s13
      %p120 = scmp.lt.s32.totalorder %s13, 3
      %p121 = pnand %p119, %p120
      %p122 = pneg %p121
      // Predicated region
      $region21: #{tpu_custom_call.1} parent=5 // pred_check
        _
      $region22: #{tpu_custom_call.1} parent=5 // pred_check_branch
        %124 = sbr.rel (%p121) target = $region24
      $region23: #{tpu_custom_call.1} parent=5 // pred_region
        %s125 = ssub.s32 %s13, 1
        %s126 = sand.u32 %s40, 1
        %s127 = scalar_lea.sflag [#allocation4], %s126
        %s128 = sand.u32 %s40, 1
        %s129 = smul.addr %s128, 8
        %s130 = scalar_lea.vmem [#allocation3], %s129
        // Predicated region
        $region25: #{tpu_custom_call.1} parent=23 // pred_check
          %p131 = pneg %p53
        $region26: #{tpu_custom_call.1} parent=23 // pred_check_branch
          %133 = sbr.rel (%p131) target = $region28
        $region27: #{tpu_custom_call.1} parent=23 // pred_region
          %134 = dma.done %s127, 128
        $region28: #{tpu_custom_call.1} parent=23 // pred_fallthru
          _
        %s135 = sand.u32 %s40, 1
        %s136 = scalar_lea.sflag [#allocation4], %s135
        %s137 = sand.u32 %s40, 1
        %s138 = smul.addr %s137, 8
        %s139 = scalar_lea.vmem [#allocation3], %s138
        %p140 = pneg %p53
        %p141 = pneg %p50
        %p142 = pneg %p79
        %p143 = pneg %p76
        %s144 = sand.u32 %s66, 1
        %s145 = scalar_lea.sflag [#allocation5], %s144
        %s146 = sand.u32 %s66, 1
        %s147 = smul.addr %s146, 4
        %s148 = scalar_lea.vmem [#allocation6], %s147
        %s149 = smul.u32 2, %s23
        %p150 = scmp.eq.s32.totalorder %s23, 0
        // Predicated region
        $region29: #{tpu_custom_call.1} parent=23 // pred_check
          %p151 = pneg %p150
        $region30: #{tpu_custom_call.1} parent=23 // pred_check_branch
          %153 = sbr.rel (%p151) target = $region32
        $region31: #{tpu_custom_call.1} parent=23 // pred_region
          %vm154 = vcmask 27648
          %155 = vst.msk [vmem:[#allocation2] sm:$0xf] %vm154, 0.0
        $region32: #{tpu_custom_call.1} parent=23 // pred_fallthru
          _
        %v156 = vld [vmem:[%s130] sm:$0xff]
        %v157 = vld [vmem:[#allocation2] sm:$0xf]
        %v159 = vcombine.high %v156, %v156
        %161 = vmatprep.subr.mxu0 %v159
        %162 = vmatpush1.xpose.msra.mxu0 %v156
        %163 = vmatprep.subr.mxu0 0.0
        %164 = vmatpush1.xpose.msra.mxu0 0.0
        %165 = vmatprep.subr.mxu0 0.0
        %166 = vmatpush1.xpose.msra.mxu0 0.0
        %167 = vmatprep.subr.mxu0 0.0
        %168 = vmatpush1.xpose.msra.mxu0 0.0
        %169 = vmatprep.subr.mxu0 0.0
        %170 = vmatpush1.xpose.msra.mxu0 0.0
        %171 = vmatprep.subr.mxu0 0.0
        %172 = vmatpush1.xpose.msra.mxu0 0.0
        %173 = vmatprep.subr.mxu0 0.0
        %174 = vmatpush1.xpose.msra.mxu0 0.0
        %175 = vmatprep.subr.mxu0 0.0
        %176 = vmatpush1.xpose.msra.mxu0 0.0
        %177 = vmatprep.subr.mxu0 0.0
        %178 = vmatpush1.xpose.msra.mxu0 0.0
        %179 = vmatprep.subr.mxu0 0.0
        %180 = vmatpush1.xpose.msra.mxu0 0.0
        %181 = vmatprep.subr.mxu0 0.0
        %182 = vmatpush1.xpose.msra.mxu0 0.0
        %183 = vmatprep.subr.mxu0 0.0
        %184 = vmatpush1.xpose.msra.mxu0 0.0
        %185 = vmatprep.subr.mxu0 0.0
        %186 = vmatpush1.xpose.msra.mxu0 0.0
        %187 = vmatprep.subr.mxu0 0.0
        %188 = vmatpush1.xpose.msra.mxu0 0.0
        %189 = vmatprep.subr.mxu0 0.0
        %190 = vmatpush1.xpose.msra.mxu0 0.0
        %191 = vmatprep.subr.mxu0 0.0
        %192 = vmatpush1.xpose.msra.mxu0 0.0
        %193 = vmatprep.subr.mxu0 0.0
        %194 = vmatpush1.xpose.msra.mxu0 0.0
        %195 = vmatprep.subr.mxu0 0.0
        %196 = vmatpush1.xpose.msra.mxu0 0.0
        %197 = vmatprep.subr.mxu0 0.0
        %198 = vmatpush1.xpose.msra.mxu0 0.0
        %199 = vmatprep.subr.mxu0 0.0
        %200 = vmatpush1.xpose.msra.mxu0 0.0
        %201 = vmatprep.subr.mxu0 0.0
        %202 = vmatpush1.xpose.msra.mxu0 0.0
        %203 = vmatprep.subr.mxu0 0.0
        %204 = vmatpush1.xpose.msra.mxu0 0.0
        %205 = vmatprep.subr.mxu0 0.0
        %206 = vmatpush1.xpose.msra.mxu0 0.0
        %207 = vmatprep.subr.mxu0 0.0
        %208 = vmatpush1.xpose.msra.mxu0 0.0
        %209 = vmatprep.subr.mxu0 0.0
        %210 = vmatpush1.xpose.msra.mxu0 0.0
        %211 = vmatprep.subr.mxu0 0.0
        %212 = vmatpush1.xpose.msra.mxu0 0.0
        %213 = vmatprep.subr.mxu0 0.0
        %214 = vmatpush1.xpose.msra.mxu0 0.0
        %215 = vmatprep.subr.mxu0 0.0
        %216 = vmatpush1.xpose.msra.mxu0 0.0
        %217 = vmatprep.subr.mxu0 0.0
        %218 = vmatpush1.xpose.msra.mxu0 0.0
        %219 = vmatprep.subr.mxu0 0.0
        %220 = vmatpush1.xpose.msra.mxu0 0.0
        %221 = vmatprep.subr.mxu0 0.0
        %222 = vmatpush1.xpose.msra.mxu0 0.0
        %223 = vmatprep.subr.mxu0 0.0
        %224 = vmatpush1.xpose.msra.mxu0 0.0
        %225 = vmatprep.mubr.f32.mxu0 %v159
        %226 = vmatmul.mubr.f32.gmra.mrb[0].mxu0 %v156
        %v227 = vpop.f32.mrb[0].mxu0
        %v228 = vadd.f32 0.0, %v227
        %v229 = vpop.f32.mrb[0].mxu0
        %230 = vdwg.mxu0
        %v231 = vadd.f32 %v157, %v228
        %vm232 = vcmask 27648
        %233 = vst.msk [vmem:[#allocation2] sm:$0xf] %vm232, %v231
        // Predicated region
        $region33: #{tpu_custom_call.1} parent=23 // pred_check
          %p234 = pneg %p150
        $region34: #{tpu_custom_call.1} parent=23 // pred_check_branch
          %236 = sbr.rel (%p234) target = $region36
        $region35: #{tpu_custom_call.1} parent=23 // pred_region
          %v237 = vld [vmem:[#allocation2] sm:$0xf]
          %v238 = vmul.f32 %v237, 0.0009765625
          %239 = vst.msk [vmem:[%s148] sm:$0xf] %vm232, %v238
        $region36: #{tpu_custom_call.1} parent=23 // pred_fallthru
          _
        %s240 = sand.u32 %s66, 1
        %s241 = scalar_lea.sflag [#allocation5], %s240
        %s242 = sand.u32 %s66, 1
        %s243 = smul.addr %s242, 4
        %s244 = scalar_lea.vmem [#allocation6], %s243
        // Predicated region
        $region37: #{tpu_custom_call.1} parent=23 // pred_check
          %p245 = pneg %p76
        $region38: #{tpu_custom_call.1} parent=23 // pred_check_branch
          %247 = sbr.rel (%p245) target = $region40
        $region39: #{tpu_custom_call.1} parent=23 // pred_region
          %s249 = ssub.s32 64, 64
          %250 = vsyncadd %s241, %s249
          %s251 = smul.addr %s22, 64
          %s252 = scalar_lea.hbm %s1, %s251
          %s254 = sshll.u32 %s244, 4
          %s255 = int_to_ptr.vmem [resolvable:$true] %s254
          %257 = dma.vmem_to_hbm [thread:$0]  %s255, 64, %s252, %s241
        $region40: #{tpu_custom_call.1} parent=23 // pred_fallthru
          _
      $region24: #{tpu_custom_call.1} parent=5 // pred_fallthru
        _
      %p258 = scmp.le.s32.totalorder 2, %s13
      // Predicated region
      $region41: #{tpu_custom_call.1} parent=5 // pred_check
        %p259 = pneg %p258
      $region42: #{tpu_custom_call.1} parent=5 // pred_check_branch
        %261 = sbr.rel (%p259) target = $region44
      $region43: #{tpu_custom_call.1} parent=5 // pred_region
        %s262 = ssub.s32 %s13, 2
        // Predicated region
        $region45: #{tpu_custom_call.1} parent=43 // pred_check
          %p263 = pneg %p82
        $region46: #{tpu_custom_call.1} parent=43 // pred_check_branch
          %265 = sbr.rel (%p263) target = $region48
        $region47: #{tpu_custom_call.1} parent=43 // pred_region
          %s266 = sand.u32 %s67, 1
          %s267 = scalar_lea.sflag [#allocation5], %s266
          %s268 = sand.u32 %s67, 1
          %s269 = smul.addr %s268, 4
          %s270 = scalar_lea.vmem [#allocation6], %s269
          %271 = dma.done %s267, 64
        $region48: #{tpu_custom_call.1} parent=43 // pred_fallthru
          _
      $region44: #{tpu_custom_call.1} parent=5 // pred_fallthru
        _
    $region6: #{tpu_custom_call.1} parent=1 // loop_footer
      %s17 = sadd.s32 1, %s13
    $region7: #{tpu_custom_call.1} parent=1 // loop_footer_branch
      %12 = sbr.rel target = $region3
    $region8: #{tpu_custom_call.1} parent=1 // loop_exit
      _
    %272 = vsyncpa [#allocation4], 1
    %s273 = scalar_lea.sflag [#allocation4], 1
    %274 = vsyncpa %s273, 1
    %275 = vsyncpa [#allocation5], 1
    %s276 = scalar_lea.sflag [#allocation5], 1
    %277 = vsyncpa %s276, 1

</llo_original>
